<compile_context>
chip_gen: v7x
topology: tpu7x:2x2x1
jax: 0.10.0
libtpu: 0.0.40
codegen_flags: <defaults>
</compile_context>

<pallas_src>
import functools

import jax
import jax.numpy as jnp
from jax.experimental import pallas as pl
from jax.experimental.pallas import tpu as pltpu


# ---------------------------------------------------------------------------
# Hardware-aware constants
# ---------------------------------------------------------------------------

def _device_kind():
    try:
        return jax.devices()[0].device_kind.lower()
    except Exception:
        return ""


def _vmem_budget_bytes():
    """Physical VMEM per TensorCore minus ~16 MiB headroom for compiler scratch."""
    cap = None
    try:
        cap = int(pltpu.get_tpu_info().vmem_capacity_bytes)
    except Exception:
        cap = None
    if cap is None:
        kind = _device_kind()
        # v5e / v6e: 128 MiB per TC; v7x: 64 MiB; be conservative for unknown parts.
        cap = 128 * (1 << 20) if ("v5" in kind or "v6" in kind) else 64 * (1 << 20)
    return max(cap - 16 * (1 << 20), 32 * (1 << 20))


def _mxu_tile():
    """Native MXU tile edge: 256 on v6e/v7x, 128 on v5e and older parts."""
    kind = _device_kind()
    return 256 if ("v6" in kind or "v7" in kind) else 128


def _round_up(x, m):
    return ((x + m - 1) // m) * m


def _pad2d(a, rows, cols):
    return jnp.pad(a, ((0, rows - a.shape[0]), (0, cols - a.shape[1])))


# ---------------------------------------------------------------------------
# Path 1: fully fused single-block kernel (adj resident in VMEM)
# ---------------------------------------------------------------------------

def _fused_gcn_kernel(*refs, num_hidden_layers):
    """refs = [adj, x, b0, (w_i, b_i) * num_hidden_layers, w_out, b_out,
               h_out, logits_out]   (padded; adj/x/weights bf16, biases f32)."""
    adj_ref, x_ref, b0_ref = refs[0], refs[1], refs[2]
    idx = 3
    hidden = []
    for _ in range(num_hidden_layers):
        hidden.append((refs[idx], refs[idx + 1]))
        idx += 2
    w_out_ref, b_out_ref = refs[idx], refs[idx + 1]
    h_out_ref, logits_ref = refs[idx + 2], refs[idx + 3]

    adj = adj_ref[...]                                   # (Np, Np) bf16, loaded once

    # layer 0: weight=False -> relu(Ahat @ x + b0); f32 accumulation on the MXU.
    h = jnp.dot(adj, x_ref[...], preferred_element_type=jnp.float32) + b0_ref[...]
    h = jnp.maximum(h, 0.0)

    # hidden layers: relu(Ahat @ (h @ W) + b)
    for w_ref, b_ref in hidden:
        hw = jnp.dot(h.astype(jnp.bfloat16), w_ref[...],
                     preferred_element_type=jnp.float32)
        h = jnp.dot(adj, hw.astype(jnp.bfloat16),
                    preferred_element_type=jnp.float32) + b_ref[...]
        h = jnp.maximum(h, 0.0)

    h_out_ref[...] = h.astype(h_out_ref.dtype)

    # output layer (no activation): Ahat @ (h @ W_out) + b_out
    # (project first so the N^2 aggregation runs at width C, not H)
    hw = jnp.dot(h.astype(jnp.bfloat16), w_out_ref[...],
                 preferred_element_type=jnp.float32)
    logits = jnp.dot(adj, hw.astype(jnp.bfloat16),
                     preferred_element_type=jnp.float32) + b_out_ref[...]
    logits_ref[...] = logits.astype(logits_ref.dtype)


# ---------------------------------------------------------------------------
# Path 2: gridded / streaming per-layer kernel (adj tiled over (M rows, K red.))
# ---------------------------------------------------------------------------

def _gridded_layer_kernel(*refs, has_weight, apply_relu):
    """out[i] = act( (sum_k adj[i,k] @ h[k]) @ W + b )  — one (i,k) tile per step."""
    if has_weight:
        adj_ref, h_ref, w_ref, b_ref, out_ref, acc_ref = refs
    else:
        adj_ref, h_ref, b_ref, out_ref, acc_ref = refs
        w_ref = None

    k = pl.program_id(1)

    @pl.when(k == 0)
    def _():
        acc_ref[...] = jnp.zeros_like(acc_ref)

    acc_ref[...] += jnp.dot(adj_ref[...], h_ref[...],
                            preferred_element_type=jnp.float32)

    @pl.when(k == pl.num_programs(1) - 1)
    def _():
        res = acc_ref[...]
        if has_weight:
            res = jnp.dot(res.astype(jnp.bfloat16), w_ref[...],
                          preferred_element_type=jnp.float32)
        res = res + b_ref[...]
        if apply_relu:
            res = jnp.maximum(res, 0.0)
        out_ref[...] = res.astype(out_ref.dtype)


def _gridded_graph_conv(adj_bf16, h_bf16, w_bf16, b_f32, *, apply_relu, tile,
                        vmem_limit):
    """One GraphConv layer: adj streamed tile-by-tile, h/W/b resident."""
    n_p = adj_bf16.shape[0]
    h_in = h_bf16.shape[1]
    w_out_dim = w_bf16.shape[1] if w_bf16 is not None else h_in
    grid = (n_p // tile, n_p // tile)

    in_specs = [
        pl.BlockSpec((tile, tile), lambda i, k: (i, k)),      # adj tile (streamed)
        pl.BlockSpec((tile, h_in), lambda i, k: (k, 0)),      # h rows for this k
    ]
    inputs = [adj_bf16, h_bf16]
    if w_bf16 is not None:
        in_specs.append(pl.BlockSpec((h_in, w_out_dim), lambda i, k: (0, 0)))
        inputs.append(w_bf16)
    in_specs.append(pl.BlockSpec((1, w_out_dim), lambda i, k: (0, 0)))
    inputs.append(b_f32)

    flops = 2 * n_p * n_p * h_in
    if w_bf16 is not None:
        flops += 2 * n_p * h_in * w_out_dim
    bytes_accessed = (sum(int(a.size) * a.dtype.itemsize for a in inputs)
                      + n_p * w_out_dim * 4)

    kernel = functools.partial(_gridded_layer_kernel,
                               has_weight=w_bf16 is not None,
                               apply_relu=apply_relu)

    return pl.pallas_call(
        kernel,
        out_shape=jax.ShapeDtypeStruct((n_p, w_out_dim), jnp.float32),
        grid_spec=pltpu.PrefetchScalarGridSpec(
            num_scalar_prefetch=0,
            grid=grid,
            in_specs=in_specs,
            out_specs=pl.BlockSpec((tile, w_out_dim), lambda i, k: (i, 0)),
            scratch_shapes=[pltpu.VMEM((tile, h_in), jnp.float32)],
        ),
        compiler_params=pltpu.CompilerParams(
            dimension_semantics=("parallel", "arbitrary"),
            vmem_limit_bytes=vmem_limit),
        cost_estimate=pl.CostEstimate(flops=int(flops), transcendentals=0,
                                      bytes_accessed=int(bytes_accessed)),
    )(*inputs)


# ---------------------------------------------------------------------------
# Host wrapper
# ---------------------------------------------------------------------------

def gcn_forward(adj, x, params, num_layers, *, force_gridded=False):
    """Mirrors GCN.forward (eval mode). Returns (h, logits)."""
    n, h_dim = x.shape
    c_dim = params["w_out"].shape[1]
    num_hidden_layers = num_layers - 1

    h_p = _round_up(h_dim, 128)   # hidden features: lane-dense
    c_p = _round_up(c_dim, 128)   # classes: lane-dense output stores
    tile = _mxu_tile()
    budget = _vmem_budget_bytes()

    # Footprint of the fully fused, adjacency-resident path (bf16 operands).
    n_f = _round_up(n, 128)
    fused_bytes = (
        n_f * n_f * 2                                    # adj bf16
        + n_f * h_p * 2                                  # x bf16
        + num_hidden_layers * (h_p * h_p * 2 + h_p * 4)  # hidden weights + biases
        + h_p * c_p * 2 + c_p * 4 + h_p * 4              # output weights + biases
        + n_f * h_p * 4 + n_f * c_p * 4                  # outputs (f32)
        + 3 * n_f * h_p * 4                              # live f32 temporaries
    )
    use_fused = (not force_gridded) and (fused_bytes + (8 << 20) < budget)

    if use_fused:
        n_p = n_f
        inputs = [
            _pad2d(adj.astype(jnp.bfloat16), n_p, n_p),
            _pad2d(x.astype(jnp.bfloat16), n_p, h_p),
            _pad2d(params["b0"].astype(jnp.float32), 1, h_p),
        ]
        for (w, b) in params["hidden"]:
            inputs.append(_pad2d(w.astype(jnp.bfloat16), h_p, h_p))
            inputs.append(_pad2d(b.astype(jnp.float32), 1, h_p))
        inputs.append(_pad2d(params["w_out"].astype(jnp.bfloat16), h_p, c_p))
        inputs.append(_pad2d(params["b_out"].astype(jnp.float32), 1, c_p))

        flops = 2 * n_p * n_p * h_p                        # layer 0 aggregation
        flops += num_hidden_layers * (2 * n_p * h_p * h_p + 2 * n_p * n_p * h_p)
        flops += 2 * n_p * h_p * c_p + 2 * n_p * n_p * c_p
        bytes_accessed = (sum(int(a.size) * a.dtype.itemsize for a in inputs)
                          + n_p * h_p * 4 + n_p * c_p * 4)

        kernel = functools.partial(_fused_gcn_kernel,
                                   num_hidden_layers=num_hidden_layers)
        vmem_spec = pl.BlockSpec(memory_space=pltpu.MemorySpace.VMEM)
        h_pad, logits_pad = pl.pallas_call(
            kernel,
            out_shape=(jax.ShapeDtypeStruct((n_p, h_p), jnp.float32),
                       jax.ShapeDtypeStruct((n_p, c_p), jnp.float32)),
            in_specs=[vmem_spec] * len(inputs),
            out_specs=(vmem_spec, vmem_spec),
            compiler_params=pltpu.CompilerParams(vmem_limit_bytes=budget),
            cost_estimate=pl.CostEstimate(flops=int(flops), transcendentals=0,
                                          bytes_accessed=int(bytes_accessed)),
        )(*inputs)
        return h_pad[:n, :h_dim], logits_pad[:n, :c_dim]

    # ---- gridded / streaming path (adj tiled, double-buffered by the pipeline) ----
    n_p = _round_up(n, tile)
    adj_b = _pad2d(adj.astype(jnp.bfloat16), n_p, n_p)
    h_b = _pad2d(x.astype(jnp.bfloat16), n_p, h_p)
    b0 = _pad2d(params["b0"].astype(jnp.float32), 1, h_p)

    # layer 0 (weight=False): relu(Ahat @ h + b0)
    h_f32 = _gridded_graph_conv(adj_b, h_b, None, b0, apply_relu=True,
                                tile=tile, vmem_limit=budget)
    # hidden layers: relu((Ahat @ h) @ W + b)
    for (w, b) in params["hidden"]:
        w_b = _pad2d(w.astype(jnp.bfloat16), h_p, h_p)
        b_p = _pad2d(b.astype(jnp.float32), 1, h_p)
        h_f32 = _gridded_graph_conv(adj_b, h_f32.astype(jnp.bfloat16), w_b, b_p,
                                    apply_relu=True, tile=tile, vmem_limit=budget)
    # output layer (no activation): (Ahat @ h) @ W_out + b_out
    w_out_b = _pad2d(params["w_out"].astype(jnp.bfloat16), h_p, c_p)
    b_out_p = _pad2d(params["b_out"].astype(jnp.float32), 1, c_p)
    logits = _gridded_graph_conv(adj_b, h_f32.astype(jnp.bfloat16), w_out_b,
                                 b_out_p, apply_relu=False, tile=tile,
                                 vmem_limit=budget)
    return h_f32[:n, :h_dim], logits[:n, :c_dim]


# ---------------------------------------------------------------------------
# Synthetic parameters / graph (glue in plain JAX) + reference
# ---------------------------------------------------------------------------

def init_gcn_params(key, num_hidden, num_classes, num_layers):
    params = {}
    key, bk = jax.random.split(key)
    params["b0"] = (0.01 * jax.random.normal(bk, (1, num_hidden))).astype(jnp.float32)
    hidden_layers = []
    for _ in range(num_layers - 1):
        key, wk, bk = jax.random.split(key, 3)
        w = (jax.random.normal(wk, (num_hidden, num_hidden)) /
             jnp.sqrt(num_hidden)).astype(jnp.float32)
        b = (0.01 * jax.random.normal(bk, (1, num_hidden))).astype(jnp.float32)
        hidden_layers.append((w, b))
    params["hidden"] = hidden_layers
    key, wk, bk = jax.random.split(key, 3)
    params["w_out"] = (jax.random.normal(wk, (num_hidden, num_classes)) /
                       jnp.sqrt(num_hidden)).astype(jnp.float32)
    params["b_out"] = (0.01 * jax.random.normal(bk, (1, num_classes))).astype(jnp.float32)
    return params


def build_normalized_adjacency(key, n):
    """Synthetic undirected graph + self loops, Ahat = D^-1/2 A D^-1/2."""
    a = (jax.random.uniform(key, (n, n)) < 0.3).astype(jnp.float32)
    a = jnp.maximum(a, a.T)
    a = a.at[jnp.arange(n), jnp.arange(n)].set(1.0)
    deg = jnp.sum(a, axis=1)
    d_inv_sqrt = 1.0 / jnp.sqrt(deg)
    return (a * d_inv_sqrt[:, None]) * d_inv_sqrt[None, :]


def reference_forward(adj, x, params):
    """Pure-JAX f32 reference of the same math (dropout == identity in eval)."""
    h = jnp.maximum(adj @ x + params["b0"], 0.0)
    for (w, b) in params["hidden"]:
        h = jnp.maximum((adj @ h) @ w + b, 0.0)
    logits = (adj @ h) @ params["w_out"] + params["b_out"]
    return h, logits


if __name__ == "__main__":
    key = jax.random.PRNGKey(0)
    k_adj, k_x, k_p, k_adj2, k_x2, k_p2 = jax.random.split(key, 6)

    fwd = jax.jit(gcn_forward, static_argnums=(3,),
                  static_argnames=("force_gridded",))

    # ---- small demo problem: fused single-block path ----
    num_nodes, num_hidden, num_classes, num_layers = 16, 32, 8, 2
    adj = build_normalized_adjacency(k_adj, num_nodes)                        # (16, 16)
    x = jax.random.normal(k_x, (num_nodes, num_hidden), dtype=jnp.float32)    # (16, 32)
    params = init_gcn_params(k_p, num_hidden, num_classes, num_layers)

    h, logits = fwd(adj, x, params, num_layers, force_gridded=False)
    h, logits = jax.block_until_ready((h, logits))
    h_ref, logits_ref = reference_forward(adj, x, params)

    assert h.shape == (num_nodes, num_hidden)
    assert logits.shape == (num_nodes, num_classes)
    # bf16 operands with f32 accumulation vs. f32 reference -> loose tolerance.
    assert jnp.allclose(h, h_ref, atol=5e-2, rtol=5e-2)
    assert jnp.allclose(logits, logits_ref, atol=5e-2, rtol=5e-2)

    # ---- larger problem forced through the gridded / streaming path ----
    n2, nh2, nc2, nl2 = 300, 64, 8, 2
    adj2 = build_normalized_adjacency(k_adj2, n2)
    x2 = jax.random.normal(k_x2, (n2, nh2), dtype=jnp.float32)
    params2 = init_gcn_params(k_p2, nh2, nc2, nl2)

    hg, lg = fwd(adj2, x2, params2, nl2, force_gridded=True)
    hg, lg = jax.block_until_ready((hg, lg))
    hg_ref, lg_ref = reference_forward(adj2, x2, params2)

    assert hg.shape == (n2, nh2)
    assert lg.shape == (n2, nc2)
    assert jnp.allclose(hg, hg_ref, atol=5e-2, rtol=5e-2)
    assert jnp.allclose(lg, lg_ref, atol=5e-2, rtol=5e-2)

    print("KERNEL_OK")
</pallas_src>

<mosaic_0001>
module attributes {stable_mosaic.version = 11 : i64} {
  func.func @_fused_gcn_kernel(%arg0: memref<128x128xbf16, #tpu.memory_space<vmem>>, %arg1: memref<128x128xbf16, #tpu.memory_space<vmem>>, %arg2: memref<1x128xf32, #tpu.memory_space<vmem>>, %arg3: memref<128x128xbf16, #tpu.memory_space<vmem>>, %arg4: memref<1x128xf32, #tpu.memory_space<vmem>>, %arg5: memref<128x128xbf16, #tpu.memory_space<vmem>>, %arg6: memref<1x128xf32, #tpu.memory_space<vmem>>, %arg7: memref<128x128xf32, #tpu.memory_space<vmem>>, %arg8: memref<128x128xf32, #tpu.memory_space<vmem>>) attributes {dimension_semantics = [], scalar_prefetch = 0 : i64, scratch_operands = 0 : i64, tpu.core_type = #tpu.core_type<tc>} {
    %c0 = arith.constant 0 : index
    %c0_0 = arith.constant 0 : index
    %0 = vector.load %arg0[%c0, %c0_0] : memref<128x128xbf16, #tpu.memory_space<vmem>>, vector<128x128xbf16>
    %c0_1 = arith.constant 0 : index
    %c0_2 = arith.constant 0 : index
    %1 = vector.load %arg1[%c0_1, %c0_2] : memref<128x128xbf16, #tpu.memory_space<vmem>>, vector<128x128xbf16>
    %cst = arith.constant dense<0.000000e+00> : vector<128x128xf32>
    %2 = tpu.matmul %0, %1, %cst {dimension_numbers = #tpu.dot_dimension_numbers<[1], [0], [0], [1], [0, 0, 1, 1], [], []>} : vector<128x128xbf16>, vector<128x128xbf16>, vector<128x128xf32> -> vector<128x128xf32>
    %c0_3 = arith.constant 0 : index
    %c0_4 = arith.constant 0 : index
    %3 = vector.load %arg2[%c0_3, %c0_4] : memref<1x128xf32, #tpu.memory_space<vmem>>, vector<1x128xf32>
    %4 = vector.broadcast %3 : vector<1x128xf32> to vector<128x128xf32>
    %5 = arith.addf %2, %4 : vector<128x128xf32>
    %cst_5 = arith.constant 0.000000e+00 : f32
    %6 = vector.broadcast %cst_5 : f32 to vector<128x128xf32>
    %7 = arith.maximumf %5, %6 : vector<128x128xf32>
    %8 = arith.truncf %7 : vector<128x128xf32> to vector<128x128xbf16>
    %c0_6 = arith.constant 0 : index
    %c0_7 = arith.constant 0 : index
    %9 = vector.load %arg3[%c0_6, %c0_7] : memref<128x128xbf16, #tpu.memory_space<vmem>>, vector<128x128xbf16>
    %cst_8 = arith.constant dense<0.000000e+00> : vector<128x128xf32>
    %10 = tpu.matmul %8, %9, %cst_8 {dimension_numbers = #tpu.dot_dimension_numbers<[1], [0], [0], [1], [0, 0, 1, 1], [], []>} : vector<128x128xbf16>, vector<128x128xbf16>, vector<128x128xf32> -> vector<128x128xf32>
    %11 = arith.truncf %10 : vector<128x128xf32> to vector<128x128xbf16>
    %cst_9 = arith.constant dense<0.000000e+00> : vector<128x128xf32>
    %12 = tpu.matmul %0, %11, %cst_9 {dimension_numbers = #tpu.dot_dimension_numbers<[1], [0], [0], [1], [0, 0, 1, 1], [], []>} : vector<128x128xbf16>, vector<128x128xbf16>, vector<128x128xf32> -> vector<128x128xf32>
    %c0_10 = arith.constant 0 : index
    %c0_11 = arith.constant 0 : index
    %13 = vector.load %arg4[%c0_10, %c0_11] : memref<1x128xf32, #tpu.memory_space<vmem>>, vector<1x128xf32>
    %14 = vector.broadcast %13 : vector<1x128xf32> to vector<128x128xf32>
    %15 = arith.addf %12, %14 : vector<128x128xf32>
    %cst_12 = arith.constant 0.000000e+00 : f32
    %16 = vector.broadcast %cst_12 : f32 to vector<128x128xf32>
    %17 = arith.maximumf %15, %16 : vector<128x128xf32>
    %c0_13 = arith.constant 0 : index
    %c0_14 = arith.constant 0 : index
    %18 = vector.load %arg7[%c0_13, %c0_14] : memref<128x128xf32, #tpu.memory_space<vmem>>, vector<128x128xf32>
    tpu.vector_store %arg7[%c0_13, %c0_14], %17 {strides = array<i32>} : memref<128x128xf32, #tpu.memory_space<vmem>>, vector<128x128xf32>,
    %19 = arith.truncf %17 : vector<128x128xf32> to vector<128x128xbf16>
    %c0_15 = arith.constant 0 : index
    %c0_16 = arith.constant 0 : index
    %20 = vector.load %arg5[%c0_15, %c0_16] : memref<128x128xbf16, #tpu.memory_space<vmem>>, vector<128x128xbf16>
    %cst_17 = arith.constant dense<0.000000e+00> : vector<128x128xf32>
    %21 = tpu.matmul %19, %20, %cst_17 {dimension_numbers = #tpu.dot_dimension_numbers<[1], [0], [0], [1], [0, 0, 1, 1], [], []>} : vector<128x128xbf16>, vector<128x128xbf16>, vector<128x128xf32> -> vector<128x128xf32>
    %22 = arith.truncf %21 : vector<128x128xf32> to vector<128x128xbf16>
    %cst_18 = arith.constant dense<0.000000e+00> : vector<128x128xf32>
    %23 = tpu.matmul %0, %22, %cst_18 {dimension_numbers = #tpu.dot_dimension_numbers<[1], [0], [0], [1], [0, 0, 1, 1], [], []>} : vector<128x128xbf16>, vector<128x128xbf16>, vector<128x128xf32> -> vector<128x128xf32>
    %c0_19 = arith.constant 0 : index
    %c0_20 = arith.constant 0 : index
    %24 = vector.load %arg6[%c0_19, %c0_20] : memref<1x128xf32, #tpu.memory_space<vmem>>, vector<1x128xf32>
    %25 = vector.broadcast %24 : vector<1x128xf32> to vector<128x128xf32>
    %26 = arith.addf %23, %25 : vector<128x128xf32>
    %c0_21 = arith.constant 0 : index
    %c0_22 = arith.constant 0 : index
    %27 = vector.load %arg8[%c0_21, %c0_22] : memref<128x128xf32, #tpu.memory_space<vmem>>, vector<128x128xf32>
    tpu.vector_store %arg8[%c0_21, %c0_22], %26 {strides = array<i32>} : memref<128x128xf32, #tpu.memory_space<vmem>>, vector<128x128xf32>,
    return
  }
}

</mosaic_0001>

<llo_original>
// kernel: gcn_forward.1
$region0: #{gcn_forward.1}
  #allocation0 [shape = 'u32[]', space=smem, size = 0x4, offset = 0x4, fixed_abs, tag = 'smem constant byte address 0x4 - core index']
  #allocation1 [shape = 'u32[144,128]{1,0:T(1,128)}', space=vmem, size = 0x12000, scoped, tag = 'internal scratch']
  %s0 = inlined_call_operand.vmem [shape: bf16[128,128], index: 0, kind: input, shape index: {}]
  %s1 = inlined_call_operand.vmem [shape: bf16[128,128], index: 1, kind: input, shape index: {}]
  %s2 = inlined_call_operand.vmem [shape: f32[1,128], index: 2, kind: input, shape index: {}]
  %s3 = inlined_call_operand.vmem [shape: bf16[128,128], index: 3, kind: input, shape index: {}]
  %s4 = inlined_call_operand.vmem [shape: f32[1,128], index: 4, kind: input, shape index: {}]
  %s5 = inlined_call_operand.vmem [shape: bf16[128,128], index: 5, kind: input, shape index: {}]
  %s6 = inlined_call_operand.vmem [shape: f32[1,128], index: 6, kind: input, shape index: {}]
  %s7 = inlined_call_operand.vmem [shape: f32[128,128], index: 7, kind: output, shape index: {0}]
  %s8 = inlined_call_operand.vmem [shape: f32[128,128], index: 8, kind: output, shape index: {1}]
  %9 = xla_tuple %s7, %s8
  %s10 = sld [smem:[#allocation0]]
  $region46: #{gcn_forward.1} parent=0
    _
  %s12 = ssub.s32 1, %s10
  %s13 = scalar_select 0, %s12, %s10
  // Predicated region
  $region2: #{gcn_forward.1} parent=0 // pred_check
    _
  $region3: #{gcn_forward.1} parent=0 // pred_check_branch
    %15 = sbr.rel (0) target = $region5
  $region4: #{gcn_forward.1} parent=0 // pred_region
    _
  $region5: #{gcn_forward.1} parent=0 // pred_fallthru
    _
  // Predicated region
  $region6: #{gcn_forward.1} parent=0 // pred_check
    _
  $region7: #{gcn_forward.1} parent=0 // pred_check_branch
    %17 = sbr.rel (0) target = $region9
  $region8: #{gcn_forward.1} parent=0 // pred_region
    _
  $region9: #{gcn_forward.1} parent=0 // pred_fallthru
    _
  // Predicated region
  $region10: #{gcn_forward.1} parent=0 // pred_check
    _
  $region11: #{gcn_forward.1} parent=0 // pred_check_branch
    %19 = sbr.rel (0) target = $region13
  $region12: #{gcn_forward.1} parent=0 // pred_region
    _
  $region13: #{gcn_forward.1} parent=0 // pred_fallthru
    _
  // Predicated region
  $region14: #{gcn_forward.1} parent=0 // pred_check
    _
  $region15: #{gcn_forward.1} parent=0 // pred_check_branch
    %21 = sbr.rel (0) target = $region17
  $region16: #{gcn_forward.1} parent=0 // pred_region
    _
  $region17: #{gcn_forward.1} parent=0 // pred_fallthru
    _
  // Predicated region
  $region18: #{gcn_forward.1} parent=0 // pred_check
    _
  $region19: #{gcn_forward.1} parent=0 // pred_check_branch
    %23 = sbr.rel (0) target = $region21
  $region20: #{gcn_forward.1} parent=0 // pred_region
    _
  $region21: #{gcn_forward.1} parent=0 // pred_fallthru
    _
  // Predicated region
  $region22: #{gcn_forward.1} parent=0 // pred_check
    _
  $region23: #{gcn_forward.1} parent=0 // pred_check_branch
    %25 = sbr.rel (0) target = $region25
  $region24: #{gcn_forward.1} parent=0 // pred_region
    _
  $region25: #{gcn_forward.1} parent=0 // pred_fallthru
    _
  // Predicated region
  $region26: #{gcn_forward.1} parent=0 // pred_check
    _
  $region27: #{gcn_forward.1} parent=0 // pred_check_branch
    %27 = sbr.rel (0) target = $region29
  $region28: #{gcn_forward.1} parent=0 // pred_region
    _
  $region29: #{gcn_forward.1} parent=0 // pred_fallthru
    _
  %v29 = vld [vmem:[%s0] sm:$0xf]
  %v30 = vld [vmem:[%s0 + $0x4] sm:$0xf]
  %v31 = vld [vmem:[%s0 + $0x8] sm:$0xf]
  %v32 = vld [vmem:[%s0 + $0xc] sm:$0xf]
  %v33 = vld [vmem:[%s0 + $0x10] sm:$0xf]
  %v34 = vld [vmem:[%s0 + $0x14] sm:$0xf]
  %v35 = vld [vmem:[%s0 + $0x18] sm:$0xf]
  %v36 = vld [vmem:[%s0 + $0x1c] sm:$0xf]
  %v37 = vld [vmem:[%s0 + $0x20] sm:$0xf]
  %v38 = vld [vmem:[%s0 + $0x24] sm:$0xf]
  %v39 = vld [vmem:[%s0 + $0x28] sm:$0xf]
  %v40 = vld [vmem:[%s0 + $0x2c] sm:$0xf]
  %v41 = vld [vmem:[%s0 + $0x30] sm:$0xf]
  %v42 = vld [vmem:[%s0 + $0x34] sm:$0xf]
  %v43 = vld [vmem:[%s0 + $0x38] sm:$0xf]
  %v44 = vld [vmem:[%s0 + $0x3c] sm:$0xf]
  %v45 = vld [vmem:[%s1] sm:$0xf]
  %v46 = vld [vmem:[%s1 + $0x4] sm:$0xf]
  %v47 = vld [vmem:[%s1 + $0x8] sm:$0xf]
  %v48 = vld [vmem:[%s1 + $0xc] sm:$0xf]
  %v49 = vld [vmem:[%s1 + $0x10] sm:$0xf]
  %v50 = vld [vmem:[%s1 + $0x14] sm:$0xf]
  %v51 = vld [vmem:[%s1 + $0x18] sm:$0xf]
  %v52 = vld [vmem:[%s1 + $0x1c] sm:$0xf]
  %v53 = vld [vmem:[%s1 + $0x20] sm:$0xf]
  %v54 = vld [vmem:[%s1 + $0x24] sm:$0xf]
  %v55 = vld [vmem:[%s1 + $0x28] sm:$0xf]
  %v56 = vld [vmem:[%s1 + $0x2c] sm:$0xf]
  %v57 = vld [vmem:[%s1 + $0x30] sm:$0xf]
  %v58 = vld [vmem:[%s1 + $0x34] sm:$0xf]
  %v59 = vld [vmem:[%s1 + $0x38] sm:$0xf]
  %v60 = vld [vmem:[%s1 + $0x3c] sm:$0xf]
  %v61 = vld [vmem:[%s2] sm:$0x1]
  %v63 = vlaneseq
  %v64 = vshrl.u32 %v63, 7
  %v65 = vsub.s32 0, %v64
  %v66 = vrot.slane %v61, %v65
  %v84 = vunpack.c.l.b16 %v29
  %v85 = vunpack.c.l.b16 %v30
  %v86 = vunpack.c.l.b16 %v31
  %v87 = vunpack.c.l.b16 %v32
  %v88 = vunpack.c.l.b16 %v33
  %v89 = vunpack.c.l.b16 %v34
  %v90 = vunpack.c.l.b16 %v35
  %v91 = vunpack.c.l.b16 %v36
  %v92 = vunpack.c.l.b16 %v37
  %v93 = vunpack.c.l.b16 %v38
  %v94 = vunpack.c.l.b16 %v39
  %v95 = vunpack.c.l.b16 %v40
  %v96 = vunpack.c.l.b16 %v41
  %v97 = vunpack.c.l.b16 %v42
  %v98 = vunpack.c.l.b16 %v43
  %v99 = vunpack.c.l.b16 %v44
  %v100 = vpack.c.b16 %v85, %v84
  %v101 = vpack.c.b16 %v87, %v86
  %v102 = vpack.c.b16 %v89, %v88
  %v103 = vpack.c.b16 %v91, %v90
  %v104 = vpack.c.b16 %v93, %v92
  %v105 = vpack.c.b16 %v95, %v94
  %v106 = vpack.c.b16 %v97, %v96
  %v107 = vpack.c.b16 %v99, %v98
  %v132 = vunpack.c.l.b16 %v45
  %v133 = vunpack.c.l.b16 %v46
  %v134 = vunpack.c.l.b16 %v47
  %v135 = vunpack.c.l.b16 %v48
  %v136 = vunpack.c.l.b16 %v49
  %v137 = vunpack.c.l.b16 %v50
  %v138 = vunpack.c.l.b16 %v51
  %v139 = vunpack.c.l.b16 %v52
  %v140 = vunpack.c.l.b16 %v53
  %v141 = vunpack.c.l.b16 %v54
  %v142 = vunpack.c.l.b16 %v55
  %v143 = vunpack.c.l.b16 %v56
  %v144 = vunpack.c.l.b16 %v57
  %v145 = vunpack.c.l.b16 %v58
  %v146 = vunpack.c.l.b16 %v59
  %v147 = vunpack.c.l.b16 %v60
  %v148 = vpack.c.b16 %v133, %v132
  %v149 = vpack.c.b16 %v135, %v134
  %v150 = vpack.c.b16 %v137, %v136
  %v151 = vpack.c.b16 %v139, %v138
  %v152 = vpack.c.b16 %v141, %v140
  %v153 = vpack.c.b16 %v143, %v142
  %v154 = vpack.c.b16 %v145, %v144
  %v155 = vpack.c.b16 %v147, %v146
  %164 = vmatprep.subr.bf16.mxu0 0
  %165 = vmatpush1.bf16.msra.mxu0 %v148
  %166 = vmatprep.subr.bf16.mxu0 0
  %167 = vmatpush1.bf16.msra.mxu0 %v149
  %168 = vmatprep.subr.bf16.mxu0 0
  %169 = vmatpush1.bf16.msra.mxu0 %v150
  %170 = vmatprep.subr.bf16.mxu0 0
  %171 = vmatpush1.bf16.msra.mxu0 %v151
  %172 = vmatprep.subr.bf16.mxu0 0
  %173 = vmatpush1.bf16.msra.mxu0 %v152
  %174 = vmatprep.subr.bf16.mxu0 0
  %175 = vmatpush1.bf16.msra.mxu0 %v153
  %176 = vmatprep.subr.bf16.mxu0 0
  %177 = vmatpush1.bf16.msra.mxu0 %v154
  %178 = vmatprep.subr.bf16.mxu0 0
  %179 = vmatpush1.bf16.msra.mxu0 %v155
  %180 = vmatprep.subr.bf16.mxu0 0
  %181 = vmatpush1.bf16.msra.mxu0 0
  %182 = vmatprep.subr.bf16.mxu0 0
  %183 = vmatpush1.bf16.msra.mxu0 0
  %184 = vmatprep.subr.bf16.mxu0 0
  %185 = vmatpush1.bf16.msra.mxu0 0
  %186 = vmatprep.subr.bf16.mxu0 0
  %187 = vmatpush1.bf16.msra.mxu0 0
  %188 = vmatprep.subr.bf16.mxu0 0
  %189 = vmatpush1.bf16.msra.mxu0 0
  %190 = vmatprep.subr.bf16.mxu0 0
  %191 = vmatpush1.bf16.msra.mxu0 0
  %192 = vmatprep.subr.bf16.mxu0 0
  %193 = vmatpush1.bf16.msra.mxu0 0
  %194 = vmatprep.subr.bf16.mxu0 0
  %195 = vmatpush1.bf16.msra.mxu0 0
  %196 = vmatprep.mubr.bf16.mxu0 0
  %197 = vmatmul.mubr.bf16.gmra.mrb[0].mxu0 %v100
  %v198 = vpop.f32.mrb[0].mxu0
  %v199 = vadd.f32 %v66, %v198
  %v200 = vpop.f32.mrb[0].mxu0
  %v201 = vpop.f32.mrb[0].mxu0
  %v202 = vadd.f32 %v66, %v201
  %v203 = vpop.f32.mrb[0].mxu0
  %204 = vmatprep.mubr.bf16.mxu0 0
  %205 = vmatmul.mubr.bf16.gmra.mrb[0].mxu0 %v101
  %v206 = vpop.f32.mrb[0].mxu0
  %v207 = vadd.f32 %v66, %v206
  %v208 = vpop.f32.mrb[0].mxu0
  %v209 = vpop.f32.mrb[0].mxu0
  %v210 = vadd.f32 %v66, %v209
  %v211 = vpop.f32.mrb[0].mxu0
  %212 = vmatprep.mubr.bf16.mxu0 0
  %213 = vmatmul.mubr.bf16.gmra.mrb[0].mxu0 %v102
  %v214 = vpop.f32.mrb[0].mxu0
  %v215 = vadd.f32 %v66, %v214
  %v216 = vpop.f32.mrb[0].mxu0
  %v217 = vpop.f32.mrb[0].mxu0
  %v218 = vadd.f32 %v66, %v217
  %v219 = vpop.f32.mrb[0].mxu0
  %220 = vmatprep.mubr.bf16.mxu0 0
  %221 = vmatmul.mubr.bf16.gmra.mrb[0].mxu0 %v103
  %v222 = vpop.f32.mrb[0].mxu0
  %v223 = vadd.f32 %v66, %v222
  %v224 = vpop.f32.mrb[0].mxu0
  %v225 = vpop.f32.mrb[0].mxu0
  %v226 = vadd.f32 %v66, %v225
  %v227 = vpop.f32.mrb[0].mxu0
  %228 = vmatprep.mubr.bf16.mxu0 0
  %229 = vmatmul.mubr.bf16.gmra.mrb[0].mxu0 %v104
  %v230 = vpop.f32.mrb[0].mxu0
  %v231 = vadd.f32 %v66, %v230
  %v232 = vpop.f32.mrb[0].mxu0
  %v233 = vpop.f32.mrb[0].mxu0
  %v234 = vadd.f32 %v66, %v233
  %v235 = vpop.f32.mrb[0].mxu0
  %236 = vmatprep.mubr.bf16.mxu0 0
  %237 = vmatmul.mubr.bf16.gmra.mrb[0].mxu0 %v105
  %v238 = vpop.f32.mrb[0].mxu0
  %v239 = vadd.f32 %v66, %v238
  %v240 = vpop.f32.mrb[0].mxu0
  %v241 = vpop.f32.mrb[0].mxu0
  %v242 = vadd.f32 %v66, %v241
  %v243 = vpop.f32.mrb[0].mxu0
  %244 = vmatprep.mubr.bf16.mxu0 0
  %245 = vmatmul.mubr.bf16.gmra.mrb[0].mxu0 %v106
  %v246 = vpop.f32.mrb[0].mxu0
  %v247 = vadd.f32 %v66, %v246
  %v248 = vpop.f32.mrb[0].mxu0
  %v249 = vpop.f32.mrb[0].mxu0
  %v250 = vadd.f32 %v66, %v249
  %v251 = vpop.f32.mrb[0].mxu0
  %252 = vmatprep.mubr.bf16.mxu0 0
  %253 = vmatmul.mubr.bf16.gmra.mrb[0].mxu0 %v107
  %v254 = vpop.f32.mrb[0].mxu0
  %v255 = vadd.f32 %v66, %v254
  %v256 = vpop.f32.mrb[0].mxu0
  %v257 = vpop.f32.mrb[0].mxu0
  %v258 = vadd.f32 %v66, %v257
  %v259 = vpop.f32.mrb[0].mxu0
  %260 = vdwg.mxu0
  %v261 = vmax.f32 %v199, 0.0
  %v262 = vmax.f32 %v202, 0.0
  %v263 = vmax.f32 %v207, 0.0
  %v264 = vmax.f32 %v210, 0.0
  %v265 = vmax.f32 %v215, 0.0
  %v266 = vmax.f32 %v218, 0.0
  %v267 = vmax.f32 %v223, 0.0
  %v268 = vmax.f32 %v226, 0.0
  %v269 = vmax.f32 %v231, 0.0
  %v270 = vmax.f32 %v234, 0.0
  %v271 = vmax.f32 %v239, 0.0
  %v272 = vmax.f32 %v242, 0.0
  %v273 = vmax.f32 %v247, 0.0
  %v274 = vmax.f32 %v250, 0.0
  %v275 = vmax.f32 %v255, 0.0
  %v276 = vmax.f32 %v258, 0.0
  %v277 = vpack.c.bf16 %v262, %v261
  %v278 = vpack.c.bf16 %v264, %v263
  %v279 = vpack.c.bf16 %v266, %v265
  %v280 = vpack.c.bf16 %v268, %v267
  %v281 = vpack.c.bf16 %v270, %v269
  %v282 = vpack.c.bf16 %v272, %v271
  %v283 = vpack.c.bf16 %v274, %v273
  %v284 = vpack.c.bf16 %v276, %v275
  %v285 = vld [vmem:[%s3] sm:$0xf]
  %v286 = vld [vmem:[%s3 + $0x4] sm:$0xf]
  %v287 = vld [vmem:[%s3 + $0x8] sm:$0xf]
  %v288 = vld [vmem:[%s3 + $0xc] sm:$0xf]
  %v289 = vld [vmem:[%s3 + $0x10] sm:$0xf]
  %v290 = vld [vmem:[%s3 + $0x14] sm:$0xf]
  %v291 = vld [vmem:[%s3 + $0x18] sm:$0xf]
  %v292 = vld [vmem:[%s3 + $0x1c] sm:$0xf]
  %v293 = vld [vmem:[%s3 + $0x20] sm:$0xf]
  %v294 = vld [vmem:[%s3 + $0x24] sm:$0xf]
  %v295 = vld [vmem:[%s3 + $0x28] sm:$0xf]
  %v296 = vld [vmem:[%s3 + $0x2c] sm:$0xf]
  %v297 = vld [vmem:[%s3 + $0x30] sm:$0xf]
  %v298 = vld [vmem:[%s3 + $0x34] sm:$0xf]
  %v299 = vld [vmem:[%s3 + $0x38] sm:$0xf]
  %v300 = vld [vmem:[%s3 + $0x3c] sm:$0xf]
  %v317 = vunpack.c.l.b16 %v285
  %v318 = vunpack.c.l.b16 %v286
  %v319 = vunpack.c.l.b16 %v287
  %v320 = vunpack.c.l.b16 %v288
  %v321 = vunpack.c.l.b16 %v289
  %v322 = vunpack.c.l.b16 %v290
  %v323 = vunpack.c.l.b16 %v291
  %v324 = vunpack.c.l.b16 %v292
  %v325 = vunpack.c.l.b16 %v293
  %v326 = vunpack.c.l.b16 %v294
  %v327 = vunpack.c.l.b16 %v295
  %v328 = vunpack.c.l.b16 %v296
  %v329 = vunpack.c.l.b16 %v297
  %v330 = vunpack.c.l.b16 %v298
  %v331 = vunpack.c.l.b16 %v299
  %v332 = vunpack.c.l.b16 %v300
  %v333 = vpack.c.b16 %v318, %v317
  %v334 = vpack.c.b16 %v320, %v319
  %v335 = vpack.c.b16 %v322, %v321
  %v336 = vpack.c.b16 %v324, %v323
  %v337 = vpack.c.b16 %v326, %v325
  %v338 = vpack.c.b16 %v328, %v327
  %v339 = vpack.c.b16 %v330, %v329
  %v340 = vpack.c.b16 %v332, %v331
  %349 = vmatprep.subr.bf16.mxu0 0
  %350 = vmatpush1.bf16.msra.mxu0 %v333
  %351 = vmatprep.subr.bf16.mxu0 0
  %352 = vmatpush1.bf16.msra.mxu0 %v334
  %353 = vmatprep.subr.bf16.mxu0 0
  %354 = vmatpush1.bf16.msra.mxu0 %v335
  %355 = vmatprep.subr.bf16.mxu0 0
  %356 = vmatpush1.bf16.msra.mxu0 %v336
  %357 = vmatprep.subr.bf16.mxu0 0
  %358 = vmatpush1.bf16.msra.mxu0 %v337
  %359 = vmatprep.subr.bf16.mxu0 0
  %360 = vmatpush1.bf16.msra.mxu0 %v338
  %361 = vmatprep.subr.bf16.mxu0 0
  %362 = vmatpush1.bf16.msra.mxu0 %v339
  %363 = vmatprep.subr.bf16.mxu0 0
  %364 = vmatpush1.bf16.msra.mxu0 %v340
  %365 = vmatprep.subr.bf16.mxu0 0
  %366 = vmatpush1.bf16.msra.mxu0 0
  %367 = vmatprep.subr.bf16.mxu0 0
  %368 = vmatpush1.bf16.msra.mxu0 0
  %369 = vmatprep.subr.bf16.mxu0 0
  %370 = vmatpush1.bf16.msra.mxu0 0
  %371 = vmatprep.subr.bf16.mxu0 0
  %372 = vmatpush1.bf16.msra.mxu0 0
  %373 = vmatprep.subr.bf16.mxu0 0
  %374 = vmatpush1.bf16.msra.mxu0 0
  %375 = vmatprep.subr.bf16.mxu0 0
  %376 = vmatpush1.bf16.msra.mxu0 0
  %377 = vmatprep.subr.bf16.mxu0 0
  %378 = vmatpush1.bf16.msra.mxu0 0
  %379 = vmatprep.subr.bf16.mxu0 0
  %380 = vmatpush1.bf16.msra.mxu0 0
  %381 = vmatprep.mubr.bf16.mxu0 0
  %382 = vmatmul.mubr.bf16.gmra.mrb[0].mxu0 %v277
  %v383 = vpop.f32.mrb[0].mxu0
  %v384 = vadd.f32 0.0, %v383
  %v385 = vpop.f32.mrb[0].mxu0
  %v386 = vpop.f32.mrb[0].mxu0
  %v387 = vadd.f32 0.0, %v386
  %v388 = vpop.f32.mrb[0].mxu0
  %389 = vmatprep.mubr.bf16.mxu0 0
  %390 = vmatmul.mubr.bf16.gmra.mrb[0].mxu0 %v278
  %v391 = vpop.f32.mrb[0].mxu0
  %v392 = vadd.f32 0.0, %v391
  %v393 = vpop.f32.mrb[0].mxu0
  %v394 = vpop.f32.mrb[0].mxu0
  %v395 = vadd.f32 0.0, %v394
  %v396 = vpop.f32.mrb[0].mxu0
  %397 = vmatprep.mubr.bf16.mxu0 0
  %398 = vmatmul.mubr.bf16.gmra.mrb[0].mxu0 %v279
  %v399 = vpop.f32.mrb[0].mxu0
  %v400 = vadd.f32 0.0, %v399
  %v401 = vpop.f32.mrb[0].mxu0
  %v402 = vpop.f32.mrb[0].mxu0
  %v403 = vadd.f32 0.0, %v402
  %v404 = vpop.f32.mrb[0].mxu0
  %405 = vmatprep.mubr.bf16.mxu0 0
  %406 = vmatmul.mubr.bf16.gmra.mrb[0].mxu0 %v280
  %v407 = vpop.f32.mrb[0].mxu0
  %v408 = vadd.f32 0.0, %v407
  %v409 = vpop.f32.mrb[0].mxu0
  %v410 = vpop.f32.mrb[0].mxu0
  %v411 = vadd.f32 0.0, %v410
  %v412 = vpop.f32.mrb[0].mxu0
  %413 = vmatprep.mubr.bf16.mxu0 0
  %414 = vmatmul.mubr.bf16.gmra.mrb[0].mxu0 %v281
  %v415 = vpop.f32.mrb[0].mxu0
  %v416 = vadd.f32 0.0, %v415
  %v417 = vpop.f32.mrb[0].mxu0
  %v418 = vpop.f32.mrb[0].mxu0
  %v419 = vadd.f32 0.0, %v418
  %v420 = vpop.f32.mrb[0].mxu0
  %421 = vmatprep.mubr.bf16.mxu0 0
  %422 = vmatmul.mubr.bf16.gmra.mrb[0].mxu0 %v282
  %v423 = vpop.f32.mrb[0].mxu0
  %v424 = vadd.f32 0.0, %v423
  %v425 = vpop.f32.mrb[0].mxu0
  %v426 = vpop.f32.mrb[0].mxu0
  %v427 = vadd.f32 0.0, %v426
  %v428 = vpop.f32.mrb[0].mxu0
  %429 = vmatprep.mubr.bf16.mxu0 0
  %430 = vmatmul.mubr.bf16.gmra.mrb[0].mxu0 %v283
  %v431 = vpop.f32.mrb[0].mxu0
  %v432 = vadd.f32 0.0, %v431
  %v433 = vpop.f32.mrb[0].mxu0
  %v434 = vpop.f32.mrb[0].mxu0
  %v435 = vadd.f32 0.0, %v434
  %v436 = vpop.f32.mrb[0].mxu0
  %437 = vmatprep.mubr.bf16.mxu0 0
  %438 = vmatmul.mubr.bf16.gmra.mrb[0].mxu0 %v284
  %v439 = vpop.f32.mrb[0].mxu0
  %v440 = vadd.f32 0.0, %v439
  %v441 = vpop.f32.mrb[0].mxu0
  %v442 = vpop.f32.mrb[0].mxu0
  %v443 = vadd.f32 0.0, %v442
  %v444 = vpop.f32.mrb[0].mxu0
  %445 = vdwg.mxu0
  %v446 = vpack.c.bf16 %v387, %v384
  %v447 = vpack.c.bf16 %v395, %v392
  %v448 = vpack.c.bf16 %v403, %v400
  %v449 = vpack.c.bf16 %v411, %v408
  %v450 = vpack.c.bf16 %v419, %v416
  %v451 = vpack.c.bf16 %v427, %v424
  %v452 = vpack.c.bf16 %v435, %v432
  %v453 = vpack.c.bf16 %v443, %v440
  %v454 = vld [vmem:[%s4] sm:$0x1]
  %v456 = vlaneseq
  %v457 = vshrl.u32 %v456, 7
  %v458 = vsub.s32 0, %v457
  %v459 = vrot.slane %v454, %v458
  %461 = vmatprep.subr.bf16.mxu0 0
  %462 = vmatpush1.bf16.msra.mxu0 %v446
  %463 = vmatprep.subr.bf16.mxu0 0
  %464 = vmatpush1.bf16.msra.mxu0 %v447
  %465 = vmatprep.subr.bf16.mxu0 0
  %466 = vmatpush1.bf16.msra.mxu0 %v448
  %467 = vmatprep.subr.bf16.mxu0 0
  %468 = vmatpush1.bf16.msra.mxu0 %v449
  %469 = vmatprep.subr.bf16.mxu0 0
  %470 = vmatpush1.bf16.msra.mxu0 %v450
  %471 = vmatprep.subr.bf16.mxu0 0
  %472 = vmatpush1.bf16.msra.mxu0 %v451
  %473 = vmatprep.subr.bf16.mxu0 0
  %474 = vmatpush1.bf16.msra.mxu0 %v452
  %475 = vmatprep.subr.bf16.mxu0 0
  %476 = vmatpush1.bf16.msra.mxu0 %v453
  %477 = vmatprep.subr.bf16.mxu0 0
  %478 = vmatpush1.bf16.msra.mxu0 0
  %479 = vmatprep.subr.bf16.mxu0 0
  %480 = vmatpush1.bf16.msra.mxu0 0
  %481 = vmatprep.subr.bf16.mxu0 0
  %482 = vmatpush1.bf16.msra.mxu0 0
  %483 = vmatprep.subr.bf16.mxu0 0
  %484 = vmatpush1.bf16.msra.mxu0 0
  %485 = vmatprep.subr.bf16.mxu0 0
  %486 = vmatpush1.bf16.msra.mxu0 0
  %487 = vmatprep.subr.bf16.mxu0 0
  %488 = vmatpush1.bf16.msra.mxu0 0
  %489 = vmatprep.subr.bf16.mxu0 0
  %490 = vmatpush1.bf16.msra.mxu0 0
  %491 = vmatprep.subr.bf16.mxu0 0
  %492 = vmatpush1.bf16.msra.mxu0 0
  %493 = vmatprep.mubr.bf16.mxu0 0
  %494 = vmatmul.mubr.bf16.gmra.mrb[0].mxu0 %v100
  %v495 = vpop.f32.mrb[0].mxu0
  %v496 = vadd.f32 %v459, %v495
  %v497 = vpop.f32.mrb[0].mxu0
  %v498 = vpop.f32.mrb[0].mxu0
  %v499 = vadd.f32 %v459, %v498
  %v500 = vpop.f32.mrb[0].mxu0
  %501 = vmatprep.mubr.bf16.mxu0 0
  %502 = vmatmul.mubr.bf16.gmra.mrb[0].mxu0 %v101
  %v503 = vpop.f32.mrb[0].mxu0
  %v504 = vadd.f32 %v459, %v503
  %v505 = vpop.f32.mrb[0].mxu0
  %v506 = vpop.f32.mrb[0].mxu0
  %v507 = vadd.f32 %v459, %v506
  %v508 = vpop.f32.mrb[0].mxu0
  %509 = vmatprep.mubr.bf16.mxu0 0
  %510 = vmatmul.mubr.bf16.gmra.mrb[0].mxu0 %v102
  %v511 = vpop.f32.mrb[0].mxu0
  %v512 = vadd.f32 %v459, %v511
  %v513 = vpop.f32.mrb[0].mxu0
  %v514 = vpop.f32.mrb[0].mxu0
  %v515 = vadd.f32 %v459, %v514
  %v516 = vpop.f32.mrb[0].mxu0
  %517 = vmatprep.mubr.bf16.mxu0 0
  %518 = vmatmul.mubr.bf16.gmra.mrb[0].mxu0 %v103
  %v519 = vpop.f32.mrb[0].mxu0
  %v520 = vadd.f32 %v459, %v519
  %v521 = vpop.f32.mrb[0].mxu0
  %v522 = vpop.f32.mrb[0].mxu0
  %v523 = vadd.f32 %v459, %v522
  %v524 = vpop.f32.mrb[0].mxu0
  %525 = vmatprep.mubr.bf16.mxu0 0
  %526 = vmatmul.mubr.bf16.gmra.mrb[0].mxu0 %v104
  %v527 = vpop.f32.mrb[0].mxu0
  %v528 = vadd.f32 %v459, %v527
  %v529 = vpop.f32.mrb[0].mxu0
  %v530 = vpop.f32.mrb[0].mxu0
  %v531 = vadd.f32 %v459, %v530
  %v532 = vpop.f32.mrb[0].mxu0
  %533 = vmatprep.mubr.bf16.mxu0 0
  %534 = vmatmul.mubr.bf16.gmra.mrb[0].mxu0 %v105
  %v535 = vpop.f32.mrb[0].mxu0
  %v536 = vadd.f32 %v459, %v535
  %v537 = vpop.f32.mrb[0].mxu0
  %v538 = vpop.f32.mrb[0].mxu0
  %v539 = vadd.f32 %v459, %v538
  %v540 = vpop.f32.mrb[0].mxu0
  %541 = vmatprep.mubr.bf16.mxu0 0
  %542 = vmatmul.mubr.bf16.gmra.mrb[0].mxu0 %v106
  %v543 = vpop.f32.mrb[0].mxu0
  %v544 = vadd.f32 %v459, %v543
  %v545 = vpop.f32.mrb[0].mxu0
  %v546 = vpop.f32.mrb[0].mxu0
  %v547 = vadd.f32 %v459, %v546
  %v548 = vpop.f32.mrb[0].mxu0
  %549 = vmatprep.mubr.bf16.mxu0 0
  %550 = vmatmul.mubr.bf16.gmra.mrb[0].mxu0 %v107
  %v551 = vpop.f32.mrb[0].mxu0
  %v552 = vadd.f32 %v459, %v551
  %v553 = vpop.f32.mrb[0].mxu0
  %v554 = vpop.f32.mrb[0].mxu0
  %v555 = vadd.f32 %v459, %v554
  %v556 = vpop.f32.mrb[0].mxu0
  %557 = vdwg.mxu0
  %v558 = vmax.f32 %v496, 0.0
  %v559 = vmax.f32 %v499, 0.0
  %v560 = vmax.f32 %v504, 0.0
  %v561 = vmax.f32 %v507, 0.0
  %v562 = vmax.f32 %v512, 0.0
  %v563 = vmax.f32 %v515, 0.0
  %v564 = vmax.f32 %v520, 0.0
  %v565 = vmax.f32 %v523, 0.0
  %v566 = vmax.f32 %v528, 0.0
  %v567 = vmax.f32 %v531, 0.0
  %v568 = vmax.f32 %v536, 0.0
  %v569 = vmax.f32 %v539, 0.0
  %v570 = vmax.f32 %v544, 0.0
  %v571 = vmax.f32 %v547, 0.0
  %v572 = vmax.f32 %v552, 0.0
  %v573 = vmax.f32 %v555, 0.0
  %574 = vst [vmem:[%s7] sm:$0xff] %v558
  %575 = vst [vmem:[%s7 + $0x8] sm:$0xff] %v559
  %576 = vst [vmem:[%s7 + $0x10] sm:$0xff] %v560
  %577 = vst [vmem:[%s7 + $0x18] sm:$0xff] %v561
  %578 = vst [vmem:[%s7 + $0x20] sm:$0xff] %v562
  %579 = vst [vmem:[%s7 + $0x28] sm:$0xff] %v563
  %580 = vst [vmem:[%s7 + $0x30] sm:$0xff] %v564
  %581 = vst [vmem:[%s7 + $0x38] sm:$0xff] %v565
  %582 = vst [vmem:[%s7 + $0x40] sm:$0xff] %v566
  %583 = vst [vmem:[%s7 + $0x48] sm:$0xff] %v567
  %584 = vst [vmem:[%s7 + $0x50] sm:$0xff] %v568
  %585 = vst [vmem:[%s7 + $0x58] sm:$0xff] %v569
  %586 = vst [vmem:[%s7 + $0x60] sm:$0xff] %v570
  %587 = vst [vmem:[%s7 + $0x68] sm:$0xff] %v571
  %588 = vst [vmem:[%s7 + $0x70] sm:$0xff] %v572
  %589 = vst [vmem:[%s7 + $0x78] sm:$0xff] %v573
  %v590 = vpack.c.bf16 %v559, %v558
  %v591 = vpack.c.bf16 %v561, %v560
  %v592 = vpack.c.bf16 %v563, %v562
  %v593 = vpack.c.bf16 %v565, %v564
  %v594 = vpack.c.bf16 %v567, %v566
  %v595 = vpack.c.bf16 %v569, %v568
  %v596 = vpack.c.bf16 %v571, %v570
  %v597 = vpack.c.bf16 %v573, %v572
  %v598 = vld [vmem:[%s5] sm:$0xf]
  %v599 = vld [vmem:[%s5 + $0x4] sm:$0xf]
  %v600 = vld [vmem:[%s5 + $0x8] sm:$0xf]
  %v601 = vld [vmem:[%s5 + $0xc] sm:$0xf]
  %v602 = vld [vmem:[%s5 + $0x10] sm:$0xf]
  %v603 = vld [vmem:[%s5 + $0x14] sm:$0xf]
  %v604 = vld [vmem:[%s5 + $0x18] sm:$0xf]
  %v605 = vld [vmem:[%s5 + $0x1c] sm:$0xf]
  %v606 = vld [vmem:[%s5 + $0x20] sm:$0xf]
  %v607 = vld [vmem:[%s5 + $0x24] sm:$0xf]
  %v608 = vld [vmem:[%s5 + $0x28] sm:$0xf]
  %v609 = vld [vmem:[%s5 + $0x2c] sm:$0xf]
  %v610 = vld [vmem:[%s5 + $0x30] sm:$0xf]
  %v611 = vld [vmem:[%s5 + $0x34] sm:$0xf]
  %v612 = vld [vmem:[%s5 + $0x38] sm:$0xf]
  %v613 = vld [vmem:[%s5 + $0x3c] sm:$0xf]
  %v630 = vunpack.c.l.b16 %v598
  %v631 = vunpack.c.l.b16 %v599
  %v632 = vunpack.c.l.b16 %v600
  %v633 = vunpack.c.l.b16 %v601
  %v634 = vunpack.c.l.b16 %v602
  %v635 = vunpack.c.l.b16 %v603
  %v636 = vunpack.c.l.b16 %v604
  %v637 = vunpack.c.l.b16 %v605
  %v638 = vunpack.c.l.b16 %v606
  %v639 = vunpack.c.l.b16 %v607
  %v640 = vunpack.c.l.b16 %v608
  %v641 = vunpack.c.l.b16 %v609
  %v642 = vunpack.c.l.b16 %v610
  %v643 = vunpack.c.l.b16 %v611
  %v644 = vunpack.c.l.b16 %v612
  %v645 = vunpack.c.l.b16 %v613
  %v646 = vpack.c.b16 %v631, %v630
  %v647 = vpack.c.b16 %v633, %v632
  %v648 = vpack.c.b16 %v635, %v634
  %v649 = vpack.c.b16 %v637, %v636
  %v650 = vpack.c.b16 %v639, %v638
  %v651 = vpack.c.b16 %v641, %v640
  %v652 = vpack.c.b16 %v643, %v642
  %v653 = vpack.c.b16 %v645, %v644
  %662 = vmatprep.subr.bf16.mxu0 0
  %663 = vmatpush1.bf16.msra.mxu0 %v646
  %664 = vmatprep.subr.bf16.mxu0 0
  %665 = vmatpush1.bf16.msra.mxu0 %v647
  %666 = vmatprep.subr.bf16.mxu0 0
  %667 = vmatpush1.bf16.msra.mxu0 %v648
  %668 = vmatprep.subr.bf16.mxu0 0
  %669 = vmatpush1.bf16.msra.mxu0 %v649
  %670 = vmatprep.subr.bf16.mxu0 0
  %671 = vmatpush1.bf16.msra.mxu0 %v650
  %672 = vmatprep.subr.bf16.mxu0 0
  %673 = vmatpush1.bf16.msra.mxu0 %v651
  %674 = vmatprep.subr.bf16.mxu0 0
  %675 = vmatpush1.bf16.msra.mxu0 %v652
  %676 = vmatprep.subr.bf16.mxu0 0
  %677 = vmatpush1.bf16.msra.mxu0 %v653
  %678 = vmatprep.subr.bf16.mxu0 0
  %679 = vmatpush1.bf16.msra.mxu0 0
  %680 = vmatprep.subr.bf16.mxu0 0
  %681 = vmatpush1.bf16.msra.mxu0 0
  %682 = vmatprep.subr.bf16.mxu0 0
  %683 = vmatpush1.bf16.msra.mxu0 0
  %684 = vmatprep.subr.bf16.mxu0 0
  %685 = vmatpush1.bf16.msra.mxu0 0
  %686 = vmatprep.subr.bf16.mxu0 0
  %687 = vmatpush1.bf16.msra.mxu0 0
  %688 = vmatprep.subr.bf16.mxu0 0
  %689 = vmatpush1.bf16.msra.mxu0 0
  %690 = vmatprep.subr.bf16.mxu0 0
  %691 = vmatpush1.bf16.msra.mxu0 0
  %692 = vmatprep.subr.bf16.mxu0 0
  %693 = vmatpush1.bf16.msra.mxu0 0
  %694 = vmatprep.mubr.bf16.mxu0 0
  %695 = vmatmul.mubr.bf16.gmra.mrb[0].mxu0 %v590
  %v696 = vpop.f32.mrb[0].mxu0
  %v697 = vadd.f32 0.0, %v696
  %v698 = vpop.f32.mrb[0].mxu0
  %v699 = vpop.f32.mrb[0].mxu0
  %v700 = vadd.f32 0.0, %v699
  %v701 = vpop.f32.mrb[0].mxu0
  %702 = vmatprep.mubr.bf16.mxu0 0
  %703 = vmatmul.mubr.bf16.gmra.mrb[0].mxu0 %v591
  %v704 = vpop.f32.mrb[0].mxu0
  %v705 = vadd.f32 0.0, %v704
  %v706 = vpop.f32.mrb[0].mxu0
  %v707 = vpop.f32.mrb[0].mxu0
  %v708 = vadd.f32 0.0, %v707
  %v709 = vpop.f32.mrb[0].mxu0
  %710 = vmatprep.mubr.bf16.mxu0 0
  %711 = vmatmul.mubr.bf16.gmra.mrb[0].mxu0 %v592
  %v712 = vpop.f32.mrb[0].mxu0
  %v713 = vadd.f32 0.0, %v712
  %v714 = vpop.f32.mrb[0].mxu0
  %v715 = vpop.f32.mrb[0].mxu0
  %v716 = vadd.f32 0.0, %v715
  %v717 = vpop.f32.mrb[0].mxu0
  %718 = vmatprep.mubr.bf16.mxu0 0
  %719 = vmatmul.mubr.bf16.gmra.mrb[0].mxu0 %v593
  %v720 = vpop.f32.mrb[0].mxu0
  %v721 = vadd.f32 0.0, %v720
  %v722 = vpop.f32.mrb[0].mxu0
  %v723 = vpop.f32.mrb[0].mxu0
  %v724 = vadd.f32 0.0, %v723
  %v725 = vpop.f32.mrb[0].mxu0
  %726 = vmatprep.mubr.bf16.mxu0 0
  %727 = vmatmul.mubr.bf16.gmra.mrb[0].mxu0 %v594
  %v728 = vpop.f32.mrb[0].mxu0
  %v729 = vadd.f32 0.0, %v728
  %v730 = vpop.f32.mrb[0].mxu0
  %v731 = vpop.f32.mrb[0].mxu0
  %v732 = vadd.f32 0.0, %v731
  %v733 = vpop.f32.mrb[0].mxu0
  %734 = vmatprep.mubr.bf16.mxu0 0
  %735 = vmatmul.mubr.bf16.gmra.mrb[0].mxu0 %v595
  %v736 = vpop.f32.mrb[0].mxu0
  %v737 = vadd.f32 0.0, %v736
  %v738 = vpop.f32.mrb[0].mxu0
  %v739 = vpop.f32.mrb[0].mxu0
  %v740 = vadd.f32 0.0, %v739
  %v741 = vpop.f32.mrb[0].mxu0
  %742 = vmatprep.mubr.bf16.mxu0 0
  %743 = vmatmul.mubr.bf16.gmra.mrb[0].mxu0 %v596
  %v744 = vpop.f32.mrb[0].mxu0
  %v745 = vadd.f32 0.0, %v744
  %v746 = vpop.f32.mrb[0].mxu0
  %v747 = vpop.f32.mrb[0].mxu0
  %v748 = vadd.f32 0.0, %v747
  %v749 = vpop.f32.mrb[0].mxu0
  %750 = vmatprep.mubr.bf16.mxu0 0
  %751 = vmatmul.mubr.bf16.gmra.mrb[0].mxu0 %v597
  %v752 = vpop.f32.mrb[0].mxu0
  %v753 = vadd.f32 0.0, %v752
  %v754 = vpop.f32.mrb[0].mxu0
  %v755 = vpop.f32.mrb[0].mxu0
  %v756 = vadd.f32 0.0, %v755
  %v757 = vpop.f32.mrb[0].mxu0
  %758 = vdwg.mxu0
  %v759 = vpack.c.bf16 %v700, %v697
  %v760 = vpack.c.bf16 %v708, %v705
  %v761 = vpack.c.bf16 %v716, %v713
  %v762 = vpack.c.bf16 %v724, %v721
  %v763 = vpack.c.bf16 %v732, %v729
  %v764 = vpack.c.bf16 %v740, %v737
  %v765 = vpack.c.bf16 %v748, %v745
  %v766 = vpack.c.bf16 %v756, %v753
  %v767 = vld [vmem:[%s6] sm:$0x1]
  %v769 = vlaneseq
  %v770 = vshrl.u32 %v769, 7
  %v771 = vsub.s32 0, %v770
  %v772 = vrot.slane %v767, %v771
  %774 = vmatprep.subr.bf16.mxu0 0
  %775 = vmatpush1.bf16.msra.mxu0 %v759
  %776 = vmatprep.subr.bf16.mxu0 0
  %777 = vmatpush1.bf16.msra.mxu0 %v760
  %778 = vmatprep.subr.bf16.mxu0 0
  %779 = vmatpush1.bf16.msra.mxu0 %v761
  %780 = vmatprep.subr.bf16.mxu0 0
  %781 = vmatpush1.bf16.msra.mxu0 %v762
  %782 = vmatprep.subr.bf16.mxu0 0
  %783 = vmatpush1.bf16.msra.mxu0 %v763
  %784 = vmatprep.subr.bf16.mxu0 0
  %785 = vmatpush1.bf16.msra.mxu0 %v764
  %786 = vmatprep.subr.bf16.mxu0 0
  %787 = vmatpush1.bf16.msra.mxu0 %v765
  %788 = vmatprep.subr.bf16.mxu0 0
  %789 = vmatpush1.bf16.msra.mxu0 %v766
  %790 = vmatprep.subr.bf16.mxu0 0
  %791 = vmatpush1.bf16.msra.mxu0 0
  %792 = vmatprep.subr.bf16.mxu0 0
  %793 = vmatpush1.bf16.msra.mxu0 0
  %794 = vmatprep.subr.bf16.mxu0 0
  %795 = vmatpush1.bf16.msra.mxu0 0
  %796 = vmatprep.subr.bf16.mxu0 0
  %797 = vmatpush1.bf16.msra.mxu0 0
  %798 = vmatprep.subr.bf16.mxu0 0
  %799 = vmatpush1.bf16.msra.mxu0 0
  %800 = vmatprep.subr.bf16.mxu0 0
  %801 = vmatpush1.bf16.msra.mxu0 0
  %802 = vmatprep.subr.bf16.mxu0 0
  %803 = vmatpush1.bf16.msra.mxu0 0
  %804 = vmatprep.subr.bf16.mxu0 0
  %805 = vmatpush1.bf16.msra.mxu0 0
  %806 = vmatprep.mubr.bf16.mxu0 0
  %807 = vmatmul.mubr.bf16.gmra.mrb[0].mxu0 %v100
  %v808 = vpop.f32.mrb[0].mxu0
  %v809 = vadd.f32 %v772, %v808
  %v810 = vpop.f32.mrb[0].mxu0
  %v811 = vpop.f32.mrb[0].mxu0
  %v812 = vadd.f32 %v772, %v811
  %v813 = vpop.f32.mrb[0].mxu0
  %814 = vmatprep.mubr.bf16.mxu0 0
  %815 = vmatmul.mubr.bf16.gmra.mrb[0].mxu0 %v101
  %v816 = vpop.f32.mrb[0].mxu0
  %v817 = vadd.f32 %v772, %v816
  %v818 = vpop.f32.mrb[0].mxu0
  %v819 = vpop.f32.mrb[0].mxu0
  %v820 = vadd.f32 %v772, %v819
  %v821 = vpop.f32.mrb[0].mxu0
  %822 = vmatprep.mubr.bf16.mxu0 0
  %823 = vmatmul.mubr.bf16.gmra.mrb[0].mxu0 %v102
  %v824 = vpop.f32.mrb[0].mxu0
  %v825 = vadd.f32 %v772, %v824
  %v826 = vpop.f32.mrb[0].mxu0
  %v827 = vpop.f32.mrb[0].mxu0
  %v828 = vadd.f32 %v772, %v827
  %v829 = vpop.f32.mrb[0].mxu0
  %830 = vmatprep.mubr.bf16.mxu0 0
  %831 = vmatmul.mubr.bf16.gmra.mrb[0].mxu0 %v103
  %v832 = vpop.f32.mrb[0].mxu0
  %v833 = vadd.f32 %v772, %v832
  %v834 = vpop.f32.mrb[0].mxu0
  %v835 = vpop.f32.mrb[0].mxu0
  %v836 = vadd.f32 %v772, %v835
  %v837 = vpop.f32.mrb[0].mxu0
  %838 = vmatprep.mubr.bf16.mxu0 0
  %839 = vmatmul.mubr.bf16.gmra.mrb[0].mxu0 %v104
  %v840 = vpop.f32.mrb[0].mxu0
  %v841 = vadd.f32 %v772, %v840
  %v842 = vpop.f32.mrb[0].mxu0
  %v843 = vpop.f32.mrb[0].mxu0
  %v844 = vadd.f32 %v772, %v843
  %v845 = vpop.f32.mrb[0].mxu0
  %846 = vmatprep.mubr.bf16.mxu0 0
  %847 = vmatmul.mubr.bf16.gmra.mrb[0].mxu0 %v105
  %v848 = vpop.f32.mrb[0].mxu0
  %v849 = vadd.f32 %v772, %v848
  %v850 = vpop.f32.mrb[0].mxu0
  %v851 = vpop.f32.mrb[0].mxu0
  %v852 = vadd.f32 %v772, %v851
  %v853 = vpop.f32.mrb[0].mxu0
  %854 = vmatprep.mubr.bf16.mxu0 0
  %855 = vmatmul.mubr.bf16.gmra.mrb[0].mxu0 %v106
  %v856 = vpop.f32.mrb[0].mxu0
  %v857 = vadd.f32 %v772, %v856
  %v858 = vpop.f32.mrb[0].mxu0
  %v859 = vpop.f32.mrb[0].mxu0
  %v860 = vadd.f32 %v772, %v859
  %v861 = vpop.f32.mrb[0].mxu0
  %862 = vmatprep.mubr.bf16.mxu0 0
  %863 = vmatmul.mubr.bf16.gmra.mrb[0].mxu0 %v107
  %v864 = vpop.f32.mrb[0].mxu0
  %v865 = vadd.f32 %v772, %v864
  %v866 = vpop.f32.mrb[0].mxu0
  %v867 = vpop.f32.mrb[0].mxu0
  %v868 = vadd.f32 %v772, %v867
  %v869 = vpop.f32.mrb[0].mxu0
  %870 = vdwg.mxu0
  %871 = vst [vmem:[%s8] sm:$0xff] %v809
  %872 = vst [vmem:[%s8 + $0x8] sm:$0xff] %v812
  %873 = vst [vmem:[%s8 + $0x10] sm:$0xff] %v817
  %874 = vst [vmem:[%s8 + $0x18] sm:$0xff] %v820
  %875 = vst [vmem:[%s8 + $0x20] sm:$0xff] %v825
  %876 = vst [vmem:[%s8 + $0x28] sm:$0xff] %v828
  %877 = vst [vmem:[%s8 + $0x30] sm:$0xff] %v833
  %878 = vst [vmem:[%s8 + $0x38] sm:$0xff] %v836
  %879 = vst [vmem:[%s8 + $0x40] sm:$0xff] %v841
  %880 = vst [vmem:[%s8 + $0x48] sm:$0xff] %v844
  %881 = vst [vmem:[%s8 + $0x50] sm:$0xff] %v849
  %882 = vst [vmem:[%s8 + $0x58] sm:$0xff] %v852
  %883 = vst [vmem:[%s8 + $0x60] sm:$0xff] %v857
  %884 = vst [vmem:[%s8 + $0x68] sm:$0xff] %v860
  %885 = vst [vmem:[%s8 + $0x70] sm:$0xff] %v865
  %886 = vst [vmem:[%s8 + $0x78] sm:$0xff] %v868
  // Predicated region
  $region30: #{gcn_forward.1} parent=0 // pred_check
    _
  $region31: #{gcn_forward.1} parent=0 // pred_check_branch
    %888 = sbr.rel (0) target = $region33
  $region32: #{gcn_forward.1} parent=0 // pred_region
    _
  $region33: #{gcn_forward.1} parent=0 // pred_fallthru
    _
  // Predicated region
  $region34: #{gcn_forward.1} parent=0 // pred_check
    _
  $region35: #{gcn_forward.1} parent=0 // pred_check_branch
    %890 = sbr.rel (0) target = $region37
  $region36: #{gcn_forward.1} parent=0 // pred_region
    _
  $region37: #{gcn_forward.1} parent=0 // pred_fallthru
    _
  // Predicated region
  $region38: #{gcn_forward.1} parent=0 // pred_check
    _
  $region39: #{gcn_forward.1} parent=0 // pred_check_branch
    %892 = sbr.rel (0) target = $region41
  $region40: #{gcn_forward.1} parent=0 // pred_region
    _
  $region41: #{gcn_forward.1} parent=0 // pred_fallthru
    _
  // Predicated region
  $region42: #{gcn_forward.1} parent=0 // pred_check
    _
  $region43: #{gcn_forward.1} parent=0 // pred_check_branch
    %894 = sbr.rel (0) target = $region45
  $region44: #{gcn_forward.1} parent=0 // pred_region
    _
  $region45: #{gcn_forward.1} parent=0 // pred_fallthru
    _

</llo_original>
